<compile_context>
chip_gen: v6e
topology: v6e:2x2x1
jax: 0.10.0
libtpu: 0.0.40
codegen_flags: <defaults>
</compile_context>

<pallas_src>
import numpy as np
import jax
import jax.numpy as jnp
from jax.experimental import pallas as pl
from jax.experimental.pallas import tpu as pltpu


# ----------------------------------------------------------------------------
# Kernel: one batch instance per grid step.
#   pstack_ref : (k*n, n)          stacked eigenspace projections (grid-invariant)
#   w_ref      : (k, C_in, C_out)  per-eigenspace weights         (grid-invariant)
#   bias_ref   : (1, C_out)        sum_e b[e], f32                (grid-invariant)
#   x_ref      : (1, n, C_in)      this instance's node features
#   o_ref      : (1, n, C_out)     this instance's output (lane-dense C_out)
# ----------------------------------------------------------------------------
def _schur_kernel(pstack_ref, w_ref, bias_ref, x_ref, o_ref):
    k = w_ref.shape[0]
    n = x_ref.shape[1]

    x = x_ref[0]                                                   # (n, C_in)

    # Stage 1: project onto all k eigenspaces with ONE stacked MXU matmul
    # (M = k*n rows; no per-eigenspace broadcast of x).  f32 accumulation.
    t = jnp.dot(pstack_ref[...], x, preferred_element_type=jnp.float32)
    t = t.astype(x.dtype)            # back to compute dtype for the stage-2 MXU

    # Stage 2: per-eigenspace linear maps, statically unrolled (k is small),
    # accumulated into a single f32 slab held in vregs (no (k, n, C_out)
    # intermediate, no k-way reduction afterwards).
    acc = jnp.dot(t[0:n, :], w_ref[0], preferred_element_type=jnp.float32)
    for e in range(1, k):
        acc = acc + jnp.dot(t[e * n:(e + 1) * n, :], w_ref[e],
                            preferred_element_type=jnp.float32)

    o_ref[0] = (acc + bias_ref[...]).astype(o_ref.dtype)


def schur_layer_forward(x, projections, w, b, *, compute_dtype=jnp.bfloat16):
    """x: (B, n, C_in), projections: (k, n, n), w: (k, C_in, C_out), b: (k, C_out)."""
    B, n, c_in = x.shape
    k = projections.shape[0]
    c_out = w.shape[-1]

    # Wrapper-side layout plumbing (no contraction work here):
    #   * projections stacked to (k*n, n) so stage 1 is one matmul,
    #   * bias summed over eigenspaces once (exact for any b),
    #   * inputs cast to the MXU compute dtype (bf16 default), accumulate f32.
    pstack = projections.reshape(k * n, n).astype(compute_dtype)
    wc = w.astype(compute_dtype)
    xc = x.astype(compute_dtype)
    bias = jnp.sum(b.astype(jnp.float32), axis=0).reshape(1, c_out)

    return pl.pallas_call(
        _schur_kernel,
        out_shape=jax.ShapeDtypeStruct((B, n, c_out), jnp.float32),
        grid=(B,),
        in_specs=[
            pl.BlockSpec((k * n, n), lambda bi: (0, 0)),             # Pstack
            pl.BlockSpec((k, c_in, c_out), lambda bi: (0, 0, 0)),    # w
            pl.BlockSpec((1, c_out), lambda bi: (0, 0)),             # summed bias
            pl.BlockSpec((1, n, c_in), lambda bi: (bi, 0, 0)),       # x (per instance)
        ],
        out_specs=pl.BlockSpec((1, n, c_out), lambda bi: (bi, 0, 0)),
        compiler_params=pltpu.CompilerParams(
            dimension_semantics=("parallel",)),
    )(pstack, wc, bias, xc)


# ----------------------------------------------------------------------------
# Glue: subgraph eigenspaces (S.set_evecs / S.n_espaces) and deterministic
# parameter init (xavier_uniform w), matching the PyTorch module.
# ----------------------------------------------------------------------------
def make_subgraph_eigenspaces(n=16, tol_decimals=5):
    """Cycle graph C_n as the subgraph S; group Laplacian eigenvectors into
    eigenspaces by (rounded) eigenvalue; return (k, n, n) projection matrices."""
    adj = np.zeros((n, n), dtype=np.float64)
    for i in range(n):
        adj[i, (i + 1) % n] = 1.0
        adj[(i + 1) % n, i] = 1.0
    lap = np.diag(adj.sum(axis=1)) - adj
    evals, evecs = np.linalg.eigh(lap)
    keys = np.round(evals, tol_decimals)
    projs = []
    for u in np.unique(keys):
        V = evecs[:, keys == u]            # (n, m_e)
        projs.append(V @ V.T)              # (n, n) projection onto eigenspace
    return np.stack(projs, axis=0).astype(np.float32)  # (k, n, n)


def xavier_uniform(key, shape):
    fan_in, fan_out = shape[-2], shape[-1]
    bound = float(np.sqrt(6.0 / (fan_in + fan_out)))
    return jax.random.uniform(key, shape, jnp.float32, -bound, bound)


def reference_forward(x, projections, w, b):
    y = jnp.einsum("enm,bmc,ecd->bnd", projections, x, w,
                   preferred_element_type=jnp.float32)
    return y + jnp.sum(b, axis=0)[None, None, :]


if __name__ == "__main__":
    # Subgraph S: cycle graph with n=16 nodes -> k=9 eigenspaces.
    n_nodes = 16
    projections = jnp.asarray(make_subgraph_eigenspaces(n_nodes))   # (k, n, n)
    k = projections.shape[0]

    in_channels, out_channels = 32, 128     # lane-dense output slab (C_out = 128)
    batch = 8                               # subgraph instances in the layer

    key = jax.random.PRNGKey(0)
    kx, kw, kb = jax.random.split(key, 3)
    x = jax.random.normal(kx, (batch, n_nodes, in_channels), dtype=jnp.float32)
    w = xavier_uniform(kw, (k, in_channels, out_channels))
    # reset_parameters zero-inits b; use a small nonzero b here to genuinely
    # exercise the bias path (the summed-bias reformulation is exact for any b).
    b = 0.1 * jax.random.normal(kb, (k, out_channels), dtype=jnp.float32)

    y_ref = reference_forward(x, projections, w, b)

    # f32 compute path: tight correctness check.
    y32 = jax.block_until_ready(
        schur_layer_forward(x, projections, w, b, compute_dtype=jnp.float32))
    assert y32.shape == (batch, n_nodes, out_channels)
    np.testing.assert_allclose(np.asarray(y32), np.asarray(y_ref),
                               rtol=1e-5, atol=1e-4)

    # bf16 compute path (v6e/v7x MXU throughput), f32 accumulation:
    # bf16-level tolerance vs. the f32 mathematical reference.
    y16 = jax.block_until_ready(
        schur_layer_forward(x, projections, w, b, compute_dtype=jnp.bfloat16))
    np.testing.assert_allclose(np.asarray(y16), np.asarray(y_ref),
                               rtol=5e-2, atol=5e-2)

    print("KERNEL_OK")
</pallas_src>

<mosaic_0001>
module attributes {stable_mosaic.version = 11 : i64} {
  func.func @_schur_kernel(%arg0: i32, %arg1: memref<144x16xf32, #tpu.memory_space<vmem>>, %arg2: memref<9x32x128xf32, #tpu.memory_space<vmem>>, %arg3: memref<1x128xf32, #tpu.memory_space<vmem>>, %arg4: memref<1x16x32xf32, #tpu.memory_space<vmem>>, %arg5: memref<1x16x128xf32, #tpu.memory_space<vmem>>) attributes {dimension_semantics = [#tpu.dimension_semantics<parallel>], iteration_bounds = array<i64: 8>, scalar_prefetch = 0 : i64, scratch_operands = 0 : i64, tpu.core_type = #tpu.core_type<tc>, window_params = [{pipeline_mode = #tpu.pipeline_mode<synchronous>, transform_indices = @transform_0, window_bounds = array<i64: 144, 16>}, {pipeline_mode = #tpu.pipeline_mode<synchronous>, transform_indices = @transform_1, window_bounds = array<i64: 9, 32, 128>}, {pipeline_mode = #tpu.pipeline_mode<synchronous>, transform_indices = @transform_2, window_bounds = array<i64: 1, 128>}, {transform_indices = @transform_3, window_bounds = array<i64: 1, 16, 32>}, {transform_indices = @transform_4, window_bounds = array<i64: 1, 16, 128>}]} {
    %c0 = arith.constant 0 : index
    %c0_0 = arith.constant 0 : index
    %c0_1 = arith.constant 0 : index
    %0 = vector.load %arg4[%c0, %c0_0, %c0_1] : memref<1x16x32xf32, #tpu.memory_space<vmem>>, vector<1x16x32xf32>
    %1 = vector.shape_cast %0 : vector<1x16x32xf32> to vector<16x32xf32>
    %c0_2 = arith.constant 0 : index
    %c0_3 = arith.constant 0 : index
    %2 = vector.load %arg1[%c0_2, %c0_3] : memref<144x16xf32, #tpu.memory_space<vmem>>, vector<144x16xf32>
    %cst = arith.constant dense<0.000000e+00> : vector<144x32xf32>
    %3 = tpu.matmul %2, %1, %cst {dimension_numbers = #tpu.dot_dimension_numbers<[1], [0], [0], [1], [0, 0, 1, 1], [], []>} : vector<144x16xf32>, vector<16x32xf32>, vector<144x32xf32> -> vector<144x32xf32>
    %4 = vector.extract_strided_slice %3 {offsets = [0, 0], sizes = [16, 32], strides = [1, 1]} : vector<144x32xf32> to vector<16x32xf32>
    %c0_4 = arith.constant 0 : index
    %c0_5 = arith.constant 0 : index
    %c0_6 = arith.constant 0 : index
    %5 = vector.load %arg2[%c0_4, %c0_5, %c0_6] : memref<9x32x128xf32, #tpu.memory_space<vmem>>, vector<1x32x128xf32>
    %6 = vector.shape_cast %5 : vector<1x32x128xf32> to vector<32x128xf32>
    %cst_7 = arith.constant dense<0.000000e+00> : vector<16x128xf32>
    %7 = tpu.matmul %4, %6, %cst_7 {dimension_numbers = #tpu.dot_dimension_numbers<[1], [0], [0], [1], [0, 0, 1, 1], [], []>} : vector<16x32xf32>, vector<32x128xf32>, vector<16x128xf32> -> vector<16x128xf32>
    %8 = vector.extract_strided_slice %3 {offsets = [16, 0], sizes = [16, 32], strides = [1, 1]} : vector<144x32xf32> to vector<16x32xf32>
    %c1 = arith.constant 1 : index
    %c0_8 = arith.constant 0 : index
    %c0_9 = arith.constant 0 : index
    %9 = vector.load %arg2[%c1, %c0_8, %c0_9] : memref<9x32x128xf32, #tpu.memory_space<vmem>>, vector<1x32x128xf32>
    %10 = vector.shape_cast %9 : vector<1x32x128xf32> to vector<32x128xf32>
    %cst_10 = arith.constant dense<0.000000e+00> : vector<16x128xf32>
    %11 = tpu.matmul %8, %10, %cst_10 {dimension_numbers = #tpu.dot_dimension_numbers<[1], [0], [0], [1], [0, 0, 1, 1], [], []>} : vector<16x32xf32>, vector<32x128xf32>, vector<16x128xf32> -> vector<16x128xf32>
    %12 = arith.addf %7, %11 : vector<16x128xf32>
    %13 = vector.extract_strided_slice %3 {offsets = [32, 0], sizes = [16, 32], strides = [1, 1]} : vector<144x32xf32> to vector<16x32xf32>
    %c2 = arith.constant 2 : index
    %c0_11 = arith.constant 0 : index
    %c0_12 = arith.constant 0 : index
    %14 = vector.load %arg2[%c2, %c0_11, %c0_12] : memref<9x32x128xf32, #tpu.memory_space<vmem>>, vector<1x32x128xf32>
    %15 = vector.shape_cast %14 : vector<1x32x128xf32> to vector<32x128xf32>
    %cst_13 = arith.constant dense<0.000000e+00> : vector<16x128xf32>
    %16 = tpu.matmul %13, %15, %cst_13 {dimension_numbers = #tpu.dot_dimension_numbers<[1], [0], [0], [1], [0, 0, 1, 1], [], []>} : vector<16x32xf32>, vector<32x128xf32>, vector<16x128xf32> -> vector<16x128xf32>
    %17 = arith.addf %12, %16 : vector<16x128xf32>
    %18 = vector.extract_strided_slice %3 {offsets = [48, 0], sizes = [16, 32], strides = [1, 1]} : vector<144x32xf32> to vector<16x32xf32>
    %c3 = arith.constant 3 : index
    %c0_14 = arith.constant 0 : index
    %c0_15 = arith.constant 0 : index
    %19 = vector.load %arg2[%c3, %c0_14, %c0_15] : memref<9x32x128xf32, #tpu.memory_space<vmem>>, vector<1x32x128xf32>
    %20 = vector.shape_cast %19 : vector<1x32x128xf32> to vector<32x128xf32>
    %cst_16 = arith.constant dense<0.000000e+00> : vector<16x128xf32>
    %21 = tpu.matmul %18, %20, %cst_16 {dimension_numbers = #tpu.dot_dimension_numbers<[1], [0], [0], [1], [0, 0, 1, 1], [], []>} : vector<16x32xf32>, vector<32x128xf32>, vector<16x128xf32> -> vector<16x128xf32>
    %22 = arith.addf %17, %21 : vector<16x128xf32>
    %23 = vector.extract_strided_slice %3 {offsets = [64, 0], sizes = [16, 32], strides = [1, 1]} : vector<144x32xf32> to vector<16x32xf32>
    %c4 = arith.constant 4 : index
    %c0_17 = arith.constant 0 : index
    %c0_18 = arith.constant 0 : index
    %24 = vector.load %arg2[%c4, %c0_17, %c0_18] : memref<9x32x128xf32, #tpu.memory_space<vmem>>, vector<1x32x128xf32>
    %25 = vector.shape_cast %24 : vector<1x32x128xf32> to vector<32x128xf32>
    %cst_19 = arith.constant dense<0.000000e+00> : vector<16x128xf32>
    %26 = tpu.matmul %23, %25, %cst_19 {dimension_numbers = #tpu.dot_dimension_numbers<[1], [0], [0], [1], [0, 0, 1, 1], [], []>} : vector<16x32xf32>, vector<32x128xf32>, vector<16x128xf32> -> vector<16x128xf32>
    %27 = arith.addf %22, %26 : vector<16x128xf32>
    %28 = vector.extract_strided_slice %3 {offsets = [80, 0], sizes = [16, 32], strides = [1, 1]} : vector<144x32xf32> to vector<16x32xf32>
    %c5 = arith.constant 5 : index
    %c0_20 = arith.constant 0 : index
    %c0_21 = arith.constant 0 : index
    %29 = vector.load %arg2[%c5, %c0_20, %c0_21] : memref<9x32x128xf32, #tpu.memory_space<vmem>>, vector<1x32x128xf32>
    %30 = vector.shape_cast %29 : vector<1x32x128xf32> to vector<32x128xf32>
    %cst_22 = arith.constant dense<0.000000e+00> : vector<16x128xf32>
    %31 = tpu.matmul %28, %30, %cst_22 {dimension_numbers = #tpu.dot_dimension_numbers<[1], [0], [0], [1], [0, 0, 1, 1], [], []>} : vector<16x32xf32>, vector<32x128xf32>, vector<16x128xf32> -> vector<16x128xf32>
    %32 = arith.addf %27, %31 : vector<16x128xf32>
    %33 = vector.extract_strided_slice %3 {offsets = [96, 0], sizes = [16, 32], strides = [1, 1]} : vector<144x32xf32> to vector<16x32xf32>
    %c6 = arith.constant 6 : index
    %c0_23 = arith.constant 0 : index
    %c0_24 = arith.constant 0 : index
    %34 = vector.load %arg2[%c6, %c0_23, %c0_24] : memref<9x32x128xf32, #tpu.memory_space<vmem>>, vector<1x32x128xf32>
    %35 = vector.shape_cast %34 : vector<1x32x128xf32> to vector<32x128xf32>
    %cst_25 = arith.constant dense<0.000000e+00> : vector<16x128xf32>
    %36 = tpu.matmul %33, %35, %cst_25 {dimension_numbers = #tpu.dot_dimension_numbers<[1], [0], [0], [1], [0, 0, 1, 1], [], []>} : vector<16x32xf32>, vector<32x128xf32>, vector<16x128xf32> -> vector<16x128xf32>
    %37 = arith.addf %32, %36 : vector<16x128xf32>
    %38 = vector.extract_strided_slice %3 {offsets = [112, 0], sizes = [16, 32], strides = [1, 1]} : vector<144x32xf32> to vector<16x32xf32>
    %c7 = arith.constant 7 : index
    %c0_26 = arith.constant 0 : index
    %c0_27 = arith.constant 0 : index
    %39 = vector.load %arg2[%c7, %c0_26, %c0_27] : memref<9x32x128xf32, #tpu.memory_space<vmem>>, vector<1x32x128xf32>
    %40 = vector.shape_cast %39 : vector<1x32x128xf32> to vector<32x128xf32>
    %cst_28 = arith.constant dense<0.000000e+00> : vector<16x128xf32>
    %41 = tpu.matmul %38, %40, %cst_28 {dimension_numbers = #tpu.dot_dimension_numbers<[1], [0], [0], [1], [0, 0, 1, 1], [], []>} : vector<16x32xf32>, vector<32x128xf32>, vector<16x128xf32> -> vector<16x128xf32>
    %42 = arith.addf %37, %41 : vector<16x128xf32>
    %43 = vector.extract_strided_slice %3 {offsets = [128, 0], sizes = [16, 32], strides = [1, 1]} : vector<144x32xf32> to vector<16x32xf32>
    %c8 = arith.constant 8 : index
    %c0_29 = arith.constant 0 : index
    %c0_30 = arith.constant 0 : index
    %44 = vector.load %arg2[%c8, %c0_29, %c0_30] : memref<9x32x128xf32, #tpu.memory_space<vmem>>, vector<1x32x128xf32>
    %45 = vector.shape_cast %44 : vector<1x32x128xf32> to vector<32x128xf32>
    %cst_31 = arith.constant dense<0.000000e+00> : vector<16x128xf32>
    %46 = tpu.matmul %43, %45, %cst_31 {dimension_numbers = #tpu.dot_dimension_numbers<[1], [0], [0], [1], [0, 0, 1, 1], [], []>} : vector<16x32xf32>, vector<32x128xf32>, vector<16x128xf32> -> vector<16x128xf32>
    %47 = arith.addf %42, %46 : vector<16x128xf32>
    %c0_32 = arith.constant 0 : index
    %c0_33 = arith.constant 0 : index
    %48 = vector.load %arg3[%c0_32, %c0_33] : memref<1x128xf32, #tpu.memory_space<vmem>>, vector<1x128xf32>
    %49 = vector.broadcast %48 : vector<1x128xf32> to vector<16x128xf32>
    %50 = arith.addf %47, %49 : vector<16x128xf32>
    %c0_34 = arith.constant 0 : index
    %c0_35 = arith.constant 0 : index
    %c0_36 = arith.constant 0 : index
    %51 = vector.load %arg5[%c0_34, %c0_35, %c0_36] : memref<1x16x128xf32, #tpu.memory_space<vmem>>, vector<1x16x128xf32>
    %52 = vector.shape_cast %51 : vector<1x16x128xf32> to vector<16x128xf32>
    %53 = vector.shape_cast %50 : vector<16x128xf32> to vector<1x16x128xf32>
    tpu.vector_store %arg5[%c0_34, %c0_35, %c0_36], %53 {strides = array<i32>} : memref<1x16x128xf32, #tpu.memory_space<vmem>>, vector<1x16x128xf32>,
    return
  }
  func.func @transform_0(%arg0: i32) -> (i32, i32) {
    %c0_i32 = arith.constant 0 : i32
    %c0_i32_0 = arith.constant 0 : i32
    %c0_i32_1 = arith.constant 0 : i32
    return %c0_i32, %c0_i32_0 : i32, i32
  }
  func.func @transform_1(%arg0: i32) -> (i32, i32, i32) {
    %c0_i32 = arith.constant 0 : i32
    %c0_i32_0 = arith.constant 0 : i32
    %c0_i32_1 = arith.constant 0 : i32
    %c0_i32_2 = arith.constant 0 : i32
    return %c0_i32, %c0_i32_0, %c0_i32_1 : i32, i32, i32
  }
  func.func @transform_2(%arg0: i32) -> (i32, i32) {
    %c0_i32 = arith.constant 0 : i32
    %c0_i32_0 = arith.constant 0 : i32
    %c0_i32_1 = arith.constant 0 : i32
    return %c0_i32, %c0_i32_0 : i32, i32
  }
  func.func @transform_3(%arg0: i32) -> (i32, i32, i32) {
    %c0_i32 = arith.constant 0 : i32
    %c0_i32_0 = arith.constant 0 : i32
    %c0_i32_1 = arith.constant 0 : i32
    return %arg0, %c0_i32, %c0_i32_0 : i32, i32, i32
  }
  func.func @transform_4(%arg0: i32) -> (i32, i32, i32) {
    %c0_i32 = arith.constant 0 : i32
    %c0_i32_0 = arith.constant 0 : i32
    %c0_i32_1 = arith.constant 0 : i32
    return %arg0, %c0_i32, %c0_i32_0 : i32, i32, i32
  }
}

</mosaic_0001>

<llo_original>
// kernel: tpu_custom_call.1
$region0: #{tpu_custom_call.1}
  #allocation0 [shape = 'u32[]', space=smem, size = 0x4, offset = 0x4, fixed_abs, tag = 'smem constant byte address 0x4 - core index']
  #allocation1 [shape = 'u32[144,128]{1,0:T(1,128)}', space=vmem, size = 0x12000, scoped, tag = 'internal scratch']
  %s0 = inlined_call_operand.vmem [shape: f32[144,16], index: 0, kind: input, shape index: {}]
  %s1 = inlined_call_operand.hbm [shape: f32[9,32,128], index: 1, kind: input, shape index: {}]
  %s2 = inlined_call_operand.vmem [shape: f32[1,128], index: 2, kind: input, shape index: {}]
  %s3 = inlined_call_operand.vmem [shape: f32[8,16,32], index: 3, kind: input, shape index: {}]
  %s4 = inlined_call_operand.hbm [shape: f32[8,16,128], index: 4, kind: output, shape index: {}]
  %s5 = sld [smem:[#allocation0]]
  $region53: #{tpu_custom_call.1} parent=0
    _
  %s7 = ssub.s32 1, %s5
  %s8 = scalar_select 0, %s7, %s5
  $region1: #{tpu_custom_call.1} parent=0
    #allocation2 [shape = 'u8[147456]{0}', space=vmem, size = 0x24000, scoped, tag = 'input window, operand 1, single buffered']
    #allocation3 [shape = 's32[2]{0}', space=sflag, size = 0x8, scoped, tag = 'scoped memory for tpu_custom_call.1']
    #allocation4 [shape = 's32[2]{0}', space=sflag, size = 0x8, scoped, tag = 'scoped memory for tpu_custom_call.1']
    #allocation5 [shape = 'u8[16384]{0}', space=vmem, size = 0x4000, scoped, tag = 'output window, operand 0']
    %9 = vsyncpa [#allocation3], 0
    %10 = vsyncpa [#allocation4], 0
    %s11 = scalar_lea.sflag [#allocation4], 1
    %12 = vsyncpa %s11, 0
    loop: start=0, step=1, limit=10
    $region2: #{tpu_custom_call.1} parent=1 // loop_pre_header
      _
    $region3: #{tpu_custom_call.1} parent=1 // loop_header
      %s14 = sphi 0, %s18
      %p15 = scmp.ge.s32.totalorder %s14, 10
      %s22 = sphi 0, %s22
      %s24 = sphi 0, %s22
      %s25 = sphi 0, %s24
      %s39 = sphi 0, %s25
      %s43 = sphi 0, %s43
      %s45 = sphi 0, %s43
      %s46 = sphi 0, %s45
      %s60 = sphi 0, %s46
      %s64 = sphi 0, %s64
      %s66 = sphi 0, %s64
      %s67 = sphi 0, %s66
      %s81 = sphi 0, %s67
      %s87 = sphi 0, %s89
      %s90 = sphi 0, %s87
      %s91 = sphi 0, %s90
      %s107 = sphi 0, %s91
      %s113 = sphi 0, %s115
      %s116 = sphi 0, %s113
      %s117 = sphi 0, %s116
      %s133 = sphi 0, %s117
    $region4: #{tpu_custom_call.1} parent=1 // loop_header_branch
      %17 = sbr.rel (%p15) target = $region8
    $region5: #{tpu_custom_call.1} parent=1 // loop_body
      %s19 = ssub.s32 %s14, 1
      %s20 = ssub.s32 %s14, 2
      %s21 = sadd.s32 %s14, 1
      %s23 = sadd.s32 %s22, 1
      %p26 = scmp.eq.s32.totalorder %s14, 7
      %p27 = scmp.ne.s32.totalorder %s22, %s24
      %p28 = scmp.eq.s32.totalorder %s14, 0
      %p29 = por %p27, %p28
      %p30 = scmp.ne.s32.totalorder %s22, %s24
      %p31 = scmp.eq.s32.totalorder %s19, 7
      %p32 = por %p30, %p31
      %p33 = scmp.ne.s32.totalorder %s24, %s25
      %p34 = scmp.eq.s32.totalorder %s19, 0
      %p35 = por %p33, %p34
      %p36 = scmp.ne.s32.totalorder %s24, %s25
      %p37 = scmp.eq.s32.totalorder %s20, 7
      %p38 = por %p36, %p37
      %p40 = scmp.ne.s32.totalorder %s25, %s39
      %p41 = scmp.eq.s32.totalorder %s20, 0
      %p42 = por %p40, %p41
      %s44 = sadd.s32 %s43, 1
      %p47 = scmp.eq.s32.totalorder %s14, 7
      %p48 = scmp.ne.s32.totalorder %s43, %s45
      %p49 = scmp.eq.s32.totalorder %s14, 0
      %p50 = por %p48, %p49
      %p51 = scmp.ne.s32.totalorder %s43, %s45
      %p52 = scmp.eq.s32.totalorder %s19, 7
      %p53 = por %p51, %p52
      %p54 = scmp.ne.s32.totalorder %s45, %s46
      %p55 = scmp.eq.s32.totalorder %s19, 0
      %p56 = por %p54, %p55
      %p57 = scmp.ne.s32.totalorder %s45, %s46
      %p58 = scmp.eq.s32.totalorder %s20, 7
      %p59 = por %p57, %p58
      %p61 = scmp.ne.s32.totalorder %s46, %s60
      %p62 = scmp.eq.s32.totalorder %s20, 0
      %p63 = por %p61, %p62
      %s65 = sadd.s32 %s64, 1
      %p68 = scmp.eq.s32.totalorder %s14, 7
      %p69 = scmp.ne.s32.totalorder %s64, %s66
      %p70 = scmp.eq.s32.totalorder %s14, 0
      %p71 = por %p69, %p70
      %p72 = scmp.ne.s32.totalorder %s64, %s66
      %p73 = scmp.eq.s32.totalorder %s19, 7
      %p74 = por %p72, %p73
      %p75 = scmp.ne.s32.totalorder %s66, %s67
      %p76 = scmp.eq.s32.totalorder %s19, 0
      %p77 = por %p75, %p76
      %p78 = scmp.ne.s32.totalorder %s66, %s67
      %p79 = scmp.eq.s32.totalorder %s20, 7
      %p80 = por %p78, %p79
      %p82 = scmp.ne.s32.totalorder %s67, %s81
      %p83 = scmp.eq.s32.totalorder %s20, 0
      %p84 = por %p82, %p83
      %s85 = ssub.s32 %s14, %s21
      %p86 = scmp.eq.s32.totalorder %s85, 0
      %s88 = sadd.s32 %s87, 1
      %s89 = scalar_select %p86, %s87, %s88
      %p92 = pneg %p86
      %p93 = scmp.eq.s32.totalorder %s14, 7
      %p94 = por %p92, %p93
      %p95 = scmp.ne.s32.totalorder %s87, %s90
      %p96 = scmp.eq.s32.totalorder %s14, 0
      %p97 = por %p95, %p96
      %p98 = scmp.ne.s32.totalorder %s87, %s90
      %p99 = scmp.eq.s32.totalorder %s19, 7
      %p100 = por %p98, %p99
      %p101 = scmp.ne.s32.totalorder %s90, %s91
      %p102 = scmp.eq.s32.totalorder %s19, 0
      %p103 = por %p101, %p102
      %p104 = scmp.ne.s32.totalorder %s90, %s91
      %p105 = scmp.eq.s32.totalorder %s20, 7
      %p106 = por %p104, %p105
      %p108 = scmp.ne.s32.totalorder %s91, %s107
      %p109 = scmp.eq.s32.totalorder %s20, 0
      %p110 = por %p108, %p109
      %s111 = ssub.s32 %s14, %s21
      %p112 = scmp.eq.s32.totalorder %s111, 0
      %s114 = sadd.s32 %s113, 1
      %s115 = scalar_select %p112, %s113, %s114
      %p118 = pneg %p112
      %p119 = scmp.eq.s32.totalorder %s14, 7
      %p120 = por %p118, %p119
      %p121 = scmp.ne.s32.totalorder %s113, %s116
      %p122 = scmp.eq.s32.totalorder %s14, 0
      %p123 = por %p121, %p122
      %p124 = scmp.ne.s32.totalorder %s113, %s116
      %p125 = scmp.eq.s32.totalorder %s19, 7
      %p126 = por %p124, %p125
      %p127 = scmp.ne.s32.totalorder %s116, %s117
      %p128 = scmp.eq.s32.totalorder %s19, 0
      %p129 = por %p127, %p128
      %p130 = scmp.ne.s32.totalorder %s116, %s117
      %p131 = scmp.eq.s32.totalorder %s20, 7
      %p132 = por %p130, %p131
      %p134 = scmp.ne.s32.totalorder %s117, %s133
      %p135 = scmp.eq.s32.totalorder %s20, 0
      %p136 = por %p134, %p135
      %p137 = scmp.le.s32.totalorder 1, %s14
      %p138 = scmp.lt.s32.totalorder %s14, 9
      %p139 = pnand %p137, %p138
      %p140 = pneg %p139
      // Predicated region
      $region9: #{tpu_custom_call.1} parent=5 // pred_check
        _
      $region10: #{tpu_custom_call.1} parent=5 // pred_check_branch
        %142 = sbr.rel (%p139) target = $region12
      $region11: #{tpu_custom_call.1} parent=5 // pred_region
        %s143 = ssub.s32 %s14, 1
        // Predicated region
        $region13: #{tpu_custom_call.1} parent=11 // pred_check
          %p144 = pneg %p35
        $region14: #{tpu_custom_call.1} parent=11 // pred_check_branch
          %146 = sbr.rel (%p144) target = $region16
        $region15: #{tpu_custom_call.1} parent=11 // pred_region
          _
        $region16: #{tpu_custom_call.1} parent=11 // pred_fallthru
          _
        // Predicated region
        $region17: #{tpu_custom_call.1} parent=11 // pred_check
          %p147 = pneg %p56
        $region18: #{tpu_custom_call.1} parent=11 // pred_check_branch
          %149 = sbr.rel (%p147) target = $region20
        $region19: #{tpu_custom_call.1} parent=11 // pred_region
          %s151 = ssub.s32 4608, 4608
          %152 = vsyncadd [#allocation3], %s151
          %s153 = sshll.u32 [#allocation2], 4
          %s154 = int_to_ptr.vmem [resolvable:$true] %s153
          %159 = dma.hbm_to_vmem [thread:$0]  %s1, 4608, %s154, [#allocation3], 128, 128, 8
        $region20: #{tpu_custom_call.1} parent=11 // pred_fallthru
          _
        // Predicated region
        $region21: #{tpu_custom_call.1} parent=11 // pred_check
          %p160 = pneg %p77
        $region22: #{tpu_custom_call.1} parent=11 // pred_check_branch
          %162 = sbr.rel (%p160) target = $region24
        $region23: #{tpu_custom_call.1} parent=11 // pred_region
          _
        $region24: #{tpu_custom_call.1} parent=11 // pred_fallthru
          _
      $region12: #{tpu_custom_call.1} parent=5 // pred_fallthru
        _
      %p163 = scmp.lt.s32.totalorder %s14, 8
      // Predicated region
      $region25: #{tpu_custom_call.1} parent=5 // pred_check
        %p164 = pneg %p163
      $region26: #{tpu_custom_call.1} parent=5 // pred_check_branch
        %166 = sbr.rel (%p164) target = $region28
      $region27: #{tpu_custom_call.1} parent=5 // pred_region
        // Predicated region
        $region29: #{tpu_custom_call.1} parent=27 // pred_check
          %p167 = pneg %p97
        $region30: #{tpu_custom_call.1} parent=27 // pred_check_branch
          %169 = sbr.rel (%p167) target = $region32
        $region31: #{tpu_custom_call.1} parent=27 // pred_region
          %p170 = scmp.lt.s32.totalorder %s14, 7
          %s171 = scalar_select %p170, %s14, 7
          %s172 = smul.addr %s171, 2
          %s173 = smul.addr %s172, 8
          %s174 = scalar_lea.vmem %s3, %s173
        $region32: #{tpu_custom_call.1} parent=27 // pred_fallthru
          _
      $region28: #{tpu_custom_call.1} parent=5 // pred_fallthru
        _
      %p175 = scmp.le.s32.totalorder 1, %s14
      %p176 = scmp.lt.s32.totalorder %s14, 9
      %p177 = pnand %p175, %p176
      %p178 = pneg %p177
      // Predicated region
      $region33: #{tpu_custom_call.1} parent=5 // pred_check
        _
      $region34: #{tpu_custom_call.1} parent=5 // pred_check_branch
        %180 = sbr.rel (%p177) target = $region36
      $region35: #{tpu_custom_call.1} parent=5 // pred_region
        %s181 = ssub.s32 %s14, 1
        // Predicated region
        $region37: #{tpu_custom_call.1} parent=35 // pred_check
          %p182 = pneg %p56
        $region38: #{tpu_custom_call.1} parent=35 // pred_check_branch
          %184 = sbr.rel (%p182) target = $region40
        $region39: #{tpu_custom_call.1} parent=35 // pred_region
          %185 = dma.done [#allocation3], 4608
        $region40: #{tpu_custom_call.1} parent=35 // pred_fallthru
          _
        %p186 = pneg %p35
        %p187 = pneg %p32
        %p188 = pneg %p56
        %p189 = pneg %p53
        %p190 = pneg %p77
        %p191 = pneg %p74
        %p192 = scmp.lt.s32.totalorder %s19, 7
        %s193 = scalar_select %p192, %s19, 7
        %s194 = smul.addr %s193, 2
        %s195 = smul.addr %s194, 8
        %s196 = scalar_lea.vmem %s3, %s195
        %p197 = pneg %p103
        %p198 = pneg %p100
        %p199 = pneg %p129
        %p200 = pneg %p126
        %s201 = sand.u32 %s116, 1
        %s202 = scalar_lea.sflag [#allocation4], %s201
        %s203 = sand.u32 %s116, 1
        %s204 = smul.addr %s203, 16
        %s205 = scalar_lea.vmem [#allocation5], %s204
        %p206 = scmp.lt.s32.totalorder %s19, 7
        %s207 = scalar_select %p206, %s19, 7
        %s208 = smul.addr %s207, 2
        %s209 = smul.addr %s208, 8
        %s210 = scalar_lea.vmem %s3, %s209
        %v211 = vld [vmem:[%s210] sm:$0xff]
        %v212 = vld [vmem:[%s210 + $0x8] sm:$0xff]
        %v213 = vld [vmem:[%s0] sm:$0xff]
        %v214 = vld [vmem:[%s0 + $0x8] sm:$0xff]
        %v215 = vld [vmem:[%s0 + $0x10] sm:$0xff]
        %v216 = vld [vmem:[%s0 + $0x18] sm:$0xff]
        %v217 = vld [vmem:[%s0 + $0x20] sm:$0xff]
        %v218 = vld [vmem:[%s0 + $0x28] sm:$0xff]
        %v219 = vld [vmem:[%s0 + $0x30] sm:$0xff]
        %v220 = vld [vmem:[%s0 + $0x38] sm:$0xff]
        %v221 = vld [vmem:[%s0 + $0x40] sm:$0xff]
        %v222 = vld [vmem:[%s0 + $0x48] sm:$0xff]
        %v223 = vld [vmem:[%s0 + $0x50] sm:$0xff]
        %v224 = vld [vmem:[%s0 + $0x58] sm:$0xff]
        %v225 = vld [vmem:[%s0 + $0x60] sm:$0xff]
        %v226 = vld [vmem:[%s0 + $0x68] sm:$0xff]
        %v227 = vld [vmem:[%s0 + $0x70] sm:$0xff]
        %v228 = vld [vmem:[%s0 + $0x78] sm:$0xff]
        %v229 = vld [vmem:[%s0 + $0x80] sm:$0xff]
        %v230 = vld [vmem:[%s0 + $0x88] sm:$0xff]
        %vm231 = vcmask 130048
        %v233 = vsel %vm231, %v213, 0
        %v236 = vsel %vm231, %v214, 0
        %v239 = vsel %vm231, %v215, 0
        %v242 = vsel %vm231, %v216, 0
        %v245 = vsel %vm231, %v217, 0
        %v248 = vsel %vm231, %v218, 0
        %v251 = vsel %vm231, %v219, 0
        %v254 = vsel %vm231, %v220, 0
        %v257 = vsel %vm231, %v221, 0
        %v260 = vsel %vm231, %v222, 0
        %v263 = vsel %vm231, %v223, 0
        %v266 = vsel %vm231, %v224, 0
        %v269 = vsel %vm231, %v225, 0
        %v272 = vsel %vm231, %v226, 0
        %v275 = vsel %vm231, %v227, 0
        %v278 = vsel %vm231, %v228, 0
        %v281 = vsel %vm231, %v229, 0
        %v284 = vsel %vm231, %v230, 0
        %286 = vmatprep.subr.mxu0 0.0
        %287 = vmatpush1.msra.mxu0 0.0
        %288 = vmatprep.subr.mxu0 0.0
        %289 = vmatpush1.msra.mxu0 0.0
        %290 = vmatprep.subr.mxu0 0.0
        %291 = vmatpush1.msra.mxu0 0.0
        %292 = vmatprep.subr.mxu0 0.0
        %293 = vmatpush1.msra.mxu0 0.0
        %294 = vmatprep.subr.mxu0 0.0
        %295 = vmatpush1.msra.mxu0 0.0
        %296 = vmatprep.subr.mxu0 0.0
        %297 = vmatpush1.msra.mxu0 0.0
        %298 = vmatprep.subr.mxu0 0.0
        %299 = vmatpush1.msra.mxu0 0.0
        %300 = vmatprep.subr.mxu0 0.0
        %301 = vmatpush1.msra.mxu0 0.0
        %302 = vmatprep.subr.mxu0 0.0
        %303 = vmatpush1.msra.mxu0 0.0
        %304 = vmatprep.subr.mxu0 0.0
        %305 = vmatpush1.msra.mxu0 0.0
        %306 = vmatprep.subr.mxu0 0.0
        %307 = vmatpush1.msra.mxu0 0.0
        %308 = vmatprep.subr.mxu0 0.0
        %309 = vmatpush1.msra.mxu0 0.0
        %310 = vmatprep.subr.mxu0 0.0
        %311 = vmatpush1.msra.mxu0 0.0
        %312 = vmatprep.subr.mxu0 0.0
        %313 = vmatpush1.msra.mxu0 0.0
        %314 = vmatprep.subr.mxu0 0.0
        %315 = vmatpush1.msra.mxu0 %v212
        %316 = vmatprep.subr.mxu0 0.0
        %317 = vmatpush1.msra.mxu0 %v211
        %318 = vmatprep.subr.mxu0 0.0
        %319 = vmatpush2.msra.mxu0 0.0
        %320 = vmatprep.subr.mxu0 0.0
        %321 = vmatpush2.msra.mxu0 0.0
        %322 = vmatprep.subr.mxu0 0.0
        %323 = vmatpush2.msra.mxu0 0.0
        %324 = vmatprep.subr.mxu0 0.0
        %325 = vmatpush2.msra.mxu0 0.0
        %326 = vmatprep.subr.mxu0 0.0
        %327 = vmatpush2.msra.mxu0 0.0
        %328 = vmatprep.subr.mxu0 0.0
        %329 = vmatpush2.msra.mxu0 0.0
        %330 = vmatprep.subr.mxu0 0.0
        %331 = vmatpush2.msra.mxu0 0.0
        %332 = vmatprep.subr.mxu0 0.0
        %333 = vmatpush2.msra.mxu0 0.0
        %334 = vmatprep.subr.mxu0 0.0
        %335 = vmatpush2.msra.mxu0 0.0
        %336 = vmatprep.subr.mxu0 0.0
        %337 = vmatpush2.msra.mxu0 0.0
        %338 = vmatprep.subr.mxu0 0.0
        %339 = vmatpush2.msra.mxu0 0.0
        %340 = vmatprep.subr.mxu0 0.0
        %341 = vmatpush2.msra.mxu0 0.0
        %342 = vmatprep.subr.mxu0 0.0
        %343 = vmatpush2.msra.mxu0 0.0
        %344 = vmatprep.subr.mxu0 0.0
        %345 = vmatpush2.msra.mxu0 0.0
        %346 = vmatprep.subr.mxu0 0.0
        %347 = vmatpush2.msra.mxu0 0.0
        %348 = vmatprep.subr.mxu0 0.0
        %349 = vmatpush2.msra.mxu0 0.0
        %350 = vmatprep.mubr.f32.mxu0 0.0
        %351 = vmatmul.mubr.f32.gmra.mxu0 %v233
        %v352 = vpop.f32.mrf.mxu0
        %v353 = vadd.f32 0.0, %v352
        %v354 = vpop.f32.mrf.mxu0
        %355 = vmatprep.mubr.f32.mxu0 0.0
        %356 = vmatmul.mubr.f32.gmra.mxu0 %v236
        %v357 = vpop.f32.mrf.mxu0
        %v358 = vadd.f32 0.0, %v357
        %v359 = vpop.f32.mrf.mxu0
        %360 = vmatprep.mubr.f32.mxu0 0.0
        %361 = vmatmul.mubr.f32.gmra.mxu0 %v239
        %v362 = vpop.f32.mrf.mxu0
        %v363 = vadd.f32 0.0, %v362
        %v364 = vpop.f32.mrf.mxu0
        %365 = vmatprep.mubr.f32.mxu0 0.0
        %366 = vmatmul.mubr.f32.gmra.mxu0 %v242
        %v367 = vpop.f32.mrf.mxu0
        %v368 = vadd.f32 0.0, %v367
        %v369 = vpop.f32.mrf.mxu0
        %370 = vmatprep.mubr.f32.mxu0 0.0
        %371 = vmatmul.mubr.f32.gmra.mxu0 %v245
        %v372 = vpop.f32.mrf.mxu0
        %v373 = vadd.f32 0.0, %v372
        %v374 = vpop.f32.mrf.mxu0
        %375 = vmatprep.mubr.f32.mxu0 0.0
        %376 = vmatmul.mubr.f32.gmra.mxu0 %v248
        %v377 = vpop.f32.mrf.mxu0
        %v378 = vadd.f32 0.0, %v377
        %v379 = vpop.f32.mrf.mxu0
        %380 = vmatprep.mubr.f32.mxu0 0.0
        %381 = vmatmul.mubr.f32.gmra.mxu0 %v251
        %v382 = vpop.f32.mrf.mxu0
        %v383 = vadd.f32 0.0, %v382
        %v384 = vpop.f32.mrf.mxu0
        %385 = vmatprep.mubr.f32.mxu0 0.0
        %386 = vmatmul.mubr.f32.gmra.mxu0 %v254
        %v387 = vpop.f32.mrf.mxu0
        %v388 = vadd.f32 0.0, %v387
        %v389 = vpop.f32.mrf.mxu0
        %390 = vmatprep.mubr.f32.mxu0 0.0
        %391 = vmatmul.mubr.f32.gmra.mxu0 %v257
        %v392 = vpop.f32.mrf.mxu0
        %v393 = vadd.f32 0.0, %v392
        %v394 = vpop.f32.mrf.mxu0
        %395 = vmatprep.mubr.f32.mxu0 0.0
        %396 = vmatmul.mubr.f32.gmra.mxu0 %v260
        %v397 = vpop.f32.mrf.mxu0
        %v398 = vadd.f32 0.0, %v397
        %v399 = vpop.f32.mrf.mxu0
        %400 = vmatprep.mubr.f32.mxu0 0.0
        %401 = vmatmul.mubr.f32.gmra.mxu0 %v263
        %v402 = vpop.f32.mrf.mxu0
        %v403 = vadd.f32 0.0, %v402
        %v404 = vpop.f32.mrf.mxu0
        %405 = vmatprep.mubr.f32.mxu0 0.0
        %406 = vmatmul.mubr.f32.gmra.mxu0 %v266
        %v407 = vpop.f32.mrf.mxu0
        %v408 = vadd.f32 0.0, %v407
        %v409 = vpop.f32.mrf.mxu0
        %410 = vmatprep.mubr.f32.mxu0 0.0
        %411 = vmatmul.mubr.f32.gmra.mxu0 %v269
        %v412 = vpop.f32.mrf.mxu0
        %v413 = vadd.f32 0.0, %v412
        %v414 = vpop.f32.mrf.mxu0
        %415 = vmatprep.mubr.f32.mxu0 0.0
        %416 = vmatmul.mubr.f32.gmra.mxu0 %v272
        %v417 = vpop.f32.mrf.mxu0
        %v418 = vadd.f32 0.0, %v417
        %v419 = vpop.f32.mrf.mxu0
        %420 = vmatprep.mubr.f32.mxu0 0.0
        %421 = vmatmul.mubr.f32.gmra.mxu0 %v275
        %v422 = vpop.f32.mrf.mxu0
        %v423 = vadd.f32 0.0, %v422
        %v424 = vpop.f32.mrf.mxu0
        %425 = vmatprep.mubr.f32.mxu0 0.0
        %426 = vmatmul.mubr.f32.gmra.mxu0 %v278
        %v427 = vpop.f32.mrf.mxu0
        %v428 = vadd.f32 0.0, %v427
        %v429 = vpop.f32.mrf.mxu0
        %430 = vmatprep.mubr.f32.mxu0 0.0
        %431 = vmatmul.mubr.f32.gmra.mxu0 %v281
        %v432 = vpop.f32.mrf.mxu0
        %v433 = vadd.f32 0.0, %v432
        %v434 = vpop.f32.mrf.mxu0
        %435 = vmatprep.mubr.f32.mxu0 0.0
        %436 = vmatmul.mubr.f32.gmra.mxu0 %v284
        %v437 = vpop.f32.mrf.mxu0
        %v438 = vadd.f32 0.0, %v437
        %v439 = vpop.f32.mrf.mxu0
        %440 = vdwg.mxu0
        %v441 = vld [vmem:[#allocation2] sm:$0xff]
        %v442 = vld [vmem:[#allocation2 + $0x8] sm:$0xff]
        %v443 = vld [vmem:[#allocation2 + $0x10] sm:$0xff]
        %v444 = vld [vmem:[#allocation2 + $0x18] sm:$0xff]
        %s445 = scalar_lea.vmem [#allocation2], 32
        %v446 = vld [vmem:[%s445] sm:$0xff]
        %v447 = vld [vmem:[%s445 + $0x8] sm:$0xff]
        %v448 = vld [vmem:[%s445 + $0x10] sm:$0xff]
        %v449 = vld [vmem:[%s445 + $0x18] sm:$0xff]
        %vm450 = vcmask 261120
        %v452 = vsel %vm450, %v363, 0
        %v455 = vsel %vm450, %v368, 0
        %457 = vmatprep.subr.mxu0 0.0
        %458 = vmatpush1.msra.mxu0 0.0
        %459 = vmatprep.subr.mxu0 0.0
        %460 = vmatpush1.msra.mxu0 0.0
        %461 = vmatprep.subr.mxu0 0.0
        %462 = vmatpush1.msra.mxu0 0.0
        %463 = vmatprep.subr.mxu0 0.0
        %464 = vmatpush1.msra.mxu0 0.0
        %465 = vmatprep.subr.mxu0 0.0
        %466 = vmatpush1.msra.mxu0 0.0
        %467 = vmatprep.subr.mxu0 0.0
        %468 = vmatpush1.msra.mxu0 0.0
        %469 = vmatprep.subr.mxu0 0.0
        %470 = vmatpush1.msra.mxu0 0.0
        %471 = vmatprep.subr.mxu0 0.0
        %472 = vmatpush1.msra.mxu0 0.0
        %473 = vmatprep.subr.mxu0 0.0
        %474 = vmatpush1.msra.mxu0 0.0
        %475 = vmatprep.subr.mxu0 0.0
        %476 = vmatpush1.msra.mxu0 0.0
        %477 = vmatprep.subr.mxu0 0.0
        %478 = vmatpush1.msra.mxu0 0.0
        %479 = vmatprep.subr.mxu0 0.0
        %480 = vmatpush1.msra.mxu0 0.0
        %481 = vmatprep.subr.mxu0 0.0
        %482 = vmatpush1.msra.mxu0 %v449
        %483 = vmatprep.subr.mxu0 0.0
        %484 = vmatpush1.msra.mxu0 %v448
        %485 = vmatprep.subr.mxu0 0.0
        %486 = vmatpush1.msra.mxu0 %v447
        %487 = vmatprep.subr.mxu0 0.0
        %488 = vmatpush1.msra.mxu0 %v446
        %489 = vmatprep.subr.mxu0 0.0
        %490 = vmatpush2.msra.mxu0 0.0
        %491 = vmatprep.subr.mxu0 0.0
        %492 = vmatpush2.msra.mxu0 0.0
        %493 = vmatprep.subr.mxu0 0.0
        %494 = vmatpush2.msra.mxu0 0.0
        %495 = vmatprep.subr.mxu0 0.0
        %496 = vmatpush2.msra.mxu0 0.0
        %497 = vmatprep.subr.mxu0 0.0
        %498 = vmatpush2.msra.mxu0 0.0
        %499 = vmatprep.subr.mxu0 0.0
        %500 = vmatpush2.msra.mxu0 0.0
        %501 = vmatprep.subr.mxu0 0.0
        %502 = vmatpush2.msra.mxu0 0.0
        %503 = vmatprep.subr.mxu0 0.0
        %504 = vmatpush2.msra.mxu0 0.0
        %505 = vmatprep.subr.mxu0 0.0
        %506 = vmatpush2.msra.mxu0 0.0
        %507 = vmatprep.subr.mxu0 0.0
        %508 = vmatpush2.msra.mxu0 0.0
        %509 = vmatprep.subr.mxu0 0.0
        %510 = vmatpush2.msra.mxu0 0.0
        %511 = vmatprep.subr.mxu0 0.0
        %512 = vmatpush2.msra.mxu0 0.0
        %513 = vmatprep.subr.mxu0 0.0
        %514 = vmatpush2.msra.mxu0 0.0
        %515 = vmatprep.subr.mxu0 0.0
        %516 = vmatpush2.msra.mxu0 0.0
        %517 = vmatprep.subr.mxu0 0.0
        %518 = vmatpush2.msra.mxu0 0.0
        %519 = vmatprep.subr.mxu0 0.0
        %520 = vmatpush2.msra.mxu0 0.0
        %521 = vmatprep.mubr.f32.mxu0 0.0
        %522 = vmatmul.mubr.f32.gmra.mxu0 %v452
        %v523 = vpop.f32.mrf.mxu0
        %v524 = vadd.f32 0.0, %v523
        %v525 = vpop.f32.mrf.mxu0
        %526 = vmatprep.mubr.f32.mxu0 0.0
        %527 = vmatmul.mubr.f32.gmra.mxu0 %v455
        %v528 = vpop.f32.mrf.mxu0
        %v529 = vadd.f32 0.0, %v528
        %v530 = vpop.f32.mrf.mxu0
        %531 = vdwg.mxu0
        %v533 = vsel %vm450, %v353, 0
        %v536 = vsel %vm450, %v358, 0
        %538 = vmatprep.subr.mxu0 0.0
        %539 = vmatpush1.msra.mxu0 0.0
        %540 = vmatprep.subr.mxu0 0.0
        %541 = vmatpush1.msra.mxu0 0.0
        %542 = vmatprep.subr.mxu0 0.0
        %543 = vmatpush1.msra.mxu0 0.0
        %544 = vmatprep.subr.mxu0 0.0
        %545 = vmatpush1.msra.mxu0 0.0
        %546 = vmatprep.subr.mxu0 0.0
        %547 = vmatpush1.msra.mxu0 0.0
        %548 = vmatprep.subr.mxu0 0.0
        %549 = vmatpush1.msra.mxu0 0.0
        %550 = vmatprep.subr.mxu0 0.0
        %551 = vmatpush1.msra.mxu0 0.0
        %552 = vmatprep.subr.mxu0 0.0
        %553 = vmatpush1.msra.mxu0 0.0
        %554 = vmatprep.subr.mxu0 0.0
        %555 = vmatpush1.msra.mxu0 0.0
        %556 = vmatprep.subr.mxu0 0.0
        %557 = vmatpush1.msra.mxu0 0.0
        %558 = vmatprep.subr.mxu0 0.0
        %559 = vmatpush1.msra.mxu0 0.0
        %560 = vmatprep.subr.mxu0 0.0
        %561 = vmatpush1.msra.mxu0 0.0
        %562 = vmatprep.subr.mxu0 0.0
        %563 = vmatpush1.msra.mxu0 %v444
        %564 = vmatprep.subr.mxu0 0.0
        %565 = vmatpush1.msra.mxu0 %v443
        %566 = vmatprep.subr.mxu0 0.0
        %567 = vmatpush1.msra.mxu0 %v442
        %568 = vmatprep.subr.mxu0 0.0
        %569 = vmatpush1.msra.mxu0 %v441
        %570 = vmatprep.subr.mxu0 0.0
        %571 = vmatpush2.msra.mxu0 0.0
        %572 = vmatprep.subr.mxu0 0.0
        %573 = vmatpush2.msra.mxu0 0.0
        %574 = vmatprep.subr.mxu0 0.0
        %575 = vmatpush2.msra.mxu0 0.0
        %576 = vmatprep.subr.mxu0 0.0
        %577 = vmatpush2.msra.mxu0 0.0
        %578 = vmatprep.subr.mxu0 0.0
        %579 = vmatpush2.msra.mxu0 0.0
        %580 = vmatprep.subr.mxu0 0.0
        %581 = vmatpush2.msra.mxu0 0.0
        %582 = vmatprep.subr.mxu0 0.0
        %583 = vmatpush2.msra.mxu0 0.0
        %584 = vmatprep.subr.mxu0 0.0
        %585 = vmatpush2.msra.mxu0 0.0
        %586 = vmatprep.subr.mxu0 0.0
        %587 = vmatpush2.msra.mxu0 0.0
        %588 = vmatprep.subr.mxu0 0.0
        %589 = vmatpush2.msra.mxu0 0.0
        %590 = vmatprep.subr.mxu0 0.0
        %591 = vmatpush2.msra.mxu0 0.0
        %592 = vmatprep.subr.mxu0 0.0
        %593 = vmatpush2.msra.mxu0 0.0
        %594 = vmatprep.subr.mxu0 0.0
        %595 = vmatpush2.msra.mxu0 0.0
        %596 = vmatprep.subr.mxu0 0.0
        %597 = vmatpush2.msra.mxu0 0.0
        %598 = vmatprep.subr.mxu0 0.0
        %599 = vmatpush2.msra.mxu0 0.0
        %600 = vmatprep.subr.mxu0 0.0
        %601 = vmatpush2.msra.mxu0 0.0
        %602 = vmatprep.mubr.f32.mxu0 0.0
        %603 = vmatmul.mubr.f32.gmra.mxu0 %v533
        %v604 = vpop.f32.mrf.mxu0
        %v605 = vadd.f32 %v524, %v604
        %v606 = vpop.f32.mrf.mxu0
        %607 = vmatprep.mubr.f32.mxu0 0.0
        %608 = vmatmul.mubr.f32.gmra.mxu0 %v536
        %v609 = vpop.f32.mrf.mxu0
        %v610 = vadd.f32 %v529, %v609
        %v611 = vpop.f32.mrf.mxu0
        %612 = vdwg.mxu0
        %s613 = scalar_lea.vmem [#allocation2], 64
        %v614 = vld [vmem:[%s613] sm:$0xff]
        %v615 = vld [vmem:[%s613 + $0x8] sm:$0xff]
        %v616 = vld [vmem:[%s613 + $0x10] sm:$0xff]
        %v617 = vld [vmem:[%s613 + $0x18] sm:$0xff]
        %v619 = vsel %vm450, %v373, 0
        %v622 = vsel %vm450, %v378, 0
        %624 = vmatprep.subr.mxu0 0.0
        %625 = vmatpush1.msra.mxu0 0.0
        %626 = vmatprep.subr.mxu0 0.0
        %627 = vmatpush1.msra.mxu0 0.0
        %628 = vmatprep.subr.mxu0 0.0
        %629 = vmatpush1.msra.mxu0 0.0
        %630 = vmatprep.subr.mxu0 0.0
        %631 = vmatpush1.msra.mxu0 0.0
        %632 = vmatprep.subr.mxu0 0.0
        %633 = vmatpush1.msra.mxu0 0.0
        %634 = vmatprep.subr.mxu0 0.0
        %635 = vmatpush1.msra.mxu0 0.0
        %636 = vmatprep.subr.mxu0 0.0
        %637 = vmatpush1.msra.mxu0 0.0
        %638 = vmatprep.subr.mxu0 0.0
        %639 = vmatpush1.msra.mxu0 0.0
        %640 = vmatprep.subr.mxu0 0.0
        %641 = vmatpush1.msra.mxu0 0.0
        %642 = vmatprep.subr.mxu0 0.0
        %643 = vmatpush1.msra.mxu0 0.0
        %644 = vmatprep.subr.mxu0 0.0
        %645 = vmatpush1.msra.mxu0 0.0
        %646 = vmatprep.subr.mxu0 0.0
        %647 = vmatpush1.msra.mxu0 0.0
        %648 = vmatprep.subr.mxu0 0.0
        %649 = vmatpush1.msra.mxu0 %v617
        %650 = vmatprep.subr.mxu0 0.0
        %651 = vmatpush1.msra.mxu0 %v616
        %652 = vmatprep.subr.mxu0 0.0
        %653 = vmatpush1.msra.mxu0 %v615
        %654 = vmatprep.subr.mxu0 0.0
        %655 = vmatpush1.msra.mxu0 %v614
        %656 = vmatprep.subr.mxu0 0.0
        %657 = vmatpush2.msra.mxu0 0.0
        %658 = vmatprep.subr.mxu0 0.0
        %659 = vmatpush2.msra.mxu0 0.0
        %660 = vmatprep.subr.mxu0 0.0
        %661 = vmatpush2.msra.mxu0 0.0
        %662 = vmatprep.subr.mxu0 0.0
        %663 = vmatpush2.msra.mxu0 0.0
        %664 = vmatprep.subr.mxu0 0.0
        %665 = vmatpush2.msra.mxu0 0.0
        %666 = vmatprep.subr.mxu0 0.0
        %667 = vmatpush2.msra.mxu0 0.0
        %668 = vmatprep.subr.mxu0 0.0
        %669 = vmatpush2.msra.mxu0 0.0
        %670 = vmatprep.subr.mxu0 0.0
        %671 = vmatpush2.msra.mxu0 0.0
        %672 = vmatprep.subr.mxu0 0.0
        %673 = vmatpush2.msra.mxu0 0.0
        %674 = vmatprep.subr.mxu0 0.0
        %675 = vmatpush2.msra.mxu0 0.0
        %676 = vmatprep.subr.mxu0 0.0
        %677 = vmatpush2.msra.mxu0 0.0
        %678 = vmatprep.subr.mxu0 0.0
        %679 = vmatpush2.msra.mxu0 0.0
        %680 = vmatprep.subr.mxu0 0.0
        %681 = vmatpush2.msra.mxu0 0.0
        %682 = vmatprep.subr.mxu0 0.0
        %683 = vmatpush2.msra.mxu0 0.0
        %684 = vmatprep.subr.mxu0 0.0
        %685 = vmatpush2.msra.mxu0 0.0
        %686 = vmatprep.subr.mxu0 0.0
        %687 = vmatpush2.msra.mxu0 0.0
        %688 = vmatprep.mubr.f32.mxu0 0.0
        %689 = vmatmul.mubr.f32.gmra.mxu0 %v619
        %v690 = vpop.f32.mrf.mxu0
        %v691 = vadd.f32 0.0, %v690
        %v692 = vpop.f32.mrf.mxu0
        %693 = vmatprep.mubr.f32.mxu0 0.0
        %694 = vmatmul.mubr.f32.gmra.mxu0 %v622
        %v695 = vpop.f32.mrf.mxu0
        %v696 = vadd.f32 0.0, %v695
        %v697 = vpop.f32.mrf.mxu0
        %698 = vdwg.mxu0
        %v699 = vadd.f32 %v605, %v691
        %v700 = vadd.f32 %v610, %v696
        %s701 = scalar_lea.vmem [#allocation2], 96
        %v702 = vld [vmem:[%s701] sm:$0xff]
        %v703 = vld [vmem:[%s701 + $0x8] sm:$0xff]
        %v704 = vld [vmem:[%s701 + $0x10] sm:$0xff]
        %v705 = vld [vmem:[%s701 + $0x18] sm:$0xff]
        %v707 = vsel %vm450, %v383, 0
        %v710 = vsel %vm450, %v388, 0
        %712 = vmatprep.subr.mxu0 0.0
        %713 = vmatpush1.msra.mxu0 0.0
        %714 = vmatprep.subr.mxu0 0.0
        %715 = vmatpush1.msra.mxu0 0.0
        %716 = vmatprep.subr.mxu0 0.0
        %717 = vmatpush1.msra.mxu0 0.0
        %718 = vmatprep.subr.mxu0 0.0
        %719 = vmatpush1.msra.mxu0 0.0
        %720 = vmatprep.subr.mxu0 0.0
        %721 = vmatpush1.msra.mxu0 0.0
        %722 = vmatprep.subr.mxu0 0.0
        %723 = vmatpush1.msra.mxu0 0.0
        %724 = vmatprep.subr.mxu0 0.0
        %725 = vmatpush1.msra.mxu0 0.0
        %726 = vmatprep.subr.mxu0 0.0
        %727 = vmatpush1.msra.mxu0 0.0
        %728 = vmatprep.subr.mxu0 0.0
        %729 = vmatpush1.msra.mxu0 0.0
        %730 = vmatprep.subr.mxu0 0.0
        %731 = vmatpush1.msra.mxu0 0.0
        %732 = vmatprep.subr.mxu0 0.0
        %733 = vmatpush1.msra.mxu0 0.0
        %734 = vmatprep.subr.mxu0 0.0
        %735 = vmatpush1.msra.mxu0 0.0
        %736 = vmatprep.subr.mxu0 0.0
        %737 = vmatpush1.msra.mxu0 %v705
        %738 = vmatprep.subr.mxu0 0.0
        %739 = vmatpush1.msra.mxu0 %v704
        %740 = vmatprep.subr.mxu0 0.0
        %741 = vmatpush1.msra.mxu0 %v703
        %742 = vmatprep.subr.mxu0 0.0
        %743 = vmatpush1.msra.mxu0 %v702
        %744 = vmatprep.subr.mxu0 0.0
        %745 = vmatpush2.msra.mxu0 0.0
        %746 = vmatprep.subr.mxu0 0.0
        %747 = vmatpush2.msra.mxu0 0.0
        %748 = vmatprep.subr.mxu0 0.0
        %749 = vmatpush2.msra.mxu0 0.0
        %750 = vmatprep.subr.mxu0 0.0
        %751 = vmatpush2.msra.mxu0 0.0
        %752 = vmatprep.subr.mxu0 0.0
        %753 = vmatpush2.msra.mxu0 0.0
        %754 = vmatprep.subr.mxu0 0.0
        %755 = vmatpush2.msra.mxu0 0.0
        %756 = vmatprep.subr.mxu0 0.0
        %757 = vmatpush2.msra.mxu0 0.0
        %758 = vmatprep.subr.mxu0 0.0
        %759 = vmatpush2.msra.mxu0 0.0
        %760 = vmatprep.subr.mxu0 0.0
        %761 = vmatpush2.msra.mxu0 0.0
        %762 = vmatprep.subr.mxu0 0.0
        %763 = vmatpush2.msra.mxu0 0.0
        %764 = vmatprep.subr.mxu0 0.0
        %765 = vmatpush2.msra.mxu0 0.0
        %766 = vmatprep.subr.mxu0 0.0
        %767 = vmatpush2.msra.mxu0 0.0
        %768 = vmatprep.subr.mxu0 0.0
        %769 = vmatpush2.msra.mxu0 0.0
        %770 = vmatprep.subr.mxu0 0.0
        %771 = vmatpush2.msra.mxu0 0.0
        %772 = vmatprep.subr.mxu0 0.0
        %773 = vmatpush2.msra.mxu0 0.0
        %774 = vmatprep.subr.mxu0 0.0
        %775 = vmatpush2.msra.mxu0 0.0
        %776 = vmatprep.mubr.f32.mxu0 0.0
        %777 = vmatmul.mubr.f32.gmra.mxu0 %v707
        %v778 = vpop.f32.mrf.mxu0
        %v779 = vadd.f32 0.0, %v778
        %v780 = vpop.f32.mrf.mxu0
        %781 = vmatprep.mubr.f32.mxu0 0.0
        %782 = vmatmul.mubr.f32.gmra.mxu0 %v710
        %v783 = vpop.f32.mrf.mxu0
        %v784 = vadd.f32 0.0, %v783
        %v785 = vpop.f32.mrf.mxu0
        %786 = vdwg.mxu0
        %v787 = vadd.f32 %v699, %v779
        %v788 = vadd.f32 %v700, %v784
        %s789 = scalar_lea.vmem [#allocation2], 128
        %v790 = vld [vmem:[%s789] sm:$0xff]
        %v791 = vld [vmem:[%s789 + $0x8] sm:$0xff]
        %v792 = vld [vmem:[%s789 + $0x10] sm:$0xff]
        %v793 = vld [vmem:[%s789 + $0x18] sm:$0xff]
        %v795 = vsel %vm450, %v393, 0
        %v798 = vsel %vm450, %v398, 0
        %800 = vmatprep.subr.mxu0 0.0
        %801 = vmatpush1.msra.mxu0 0.0
        %802 = vmatprep.subr.mxu0 0.0
        %803 = vmatpush1.msra.mxu0 0.0
        %804 = vmatprep.subr.mxu0 0.0
        %805 = vmatpush1.msra.mxu0 0.0
        %806 = vmatprep.subr.mxu0 0.0
        %807 = vmatpush1.msra.mxu0 0.0
        %808 = vmatprep.subr.mxu0 0.0
        %809 = vmatpush1.msra.mxu0 0.0
        %810 = vmatprep.subr.mxu0 0.0
        %811 = vmatpush1.msra.mxu0 0.0
        %812 = vmatprep.subr.mxu0 0.0
        %813 = vmatpush1.msra.mxu0 0.0
        %814 = vmatprep.subr.mxu0 0.0
        %815 = vmatpush1.msra.mxu0 0.0
        %816 = vmatprep.subr.mxu0 0.0
        %817 = vmatpush1.msra.mxu0 0.0
        %818 = vmatprep.subr.mxu0 0.0
        %819 = vmatpush1.msra.mxu0 0.0
        %820 = vmatprep.subr.mxu0 0.0
        %821 = vmatpush1.msra.mxu0 0.0
        %822 = vmatprep.subr.mxu0 0.0
        %823 = vmatpush1.msra.mxu0 0.0
        %824 = vmatprep.subr.mxu0 0.0
        %825 = vmatpush1.msra.mxu0 %v793
        %826 = vmatprep.subr.mxu0 0.0
        %827 = vmatpush1.msra.mxu0 %v792
        %828 = vmatprep.subr.mxu0 0.0
        %829 = vmatpush1.msra.mxu0 %v791
        %830 = vmatprep.subr.mxu0 0.0
        %831 = vmatpush1.msra.mxu0 %v790
        %832 = vmatprep.subr.mxu0 0.0
        %833 = vmatpush2.msra.mxu0 0.0
        %834 = vmatprep.subr.mxu0 0.0
        %835 = vmatpush2.msra.mxu0 0.0
        %836 = vmatprep.subr.mxu0 0.0
        %837 = vmatpush2.msra.mxu0 0.0
        %838 = vmatprep.subr.mxu0 0.0
        %839 = vmatpush2.msra.mxu0 0.0
        %840 = vmatprep.subr.mxu0 0.0
        %841 = vmatpush2.msra.mxu0 0.0
        %842 = vmatprep.subr.mxu0 0.0
        %843 = vmatpush2.msra.mxu0 0.0
        %844 = vmatprep.subr.mxu0 0.0
        %845 = vmatpush2.msra.mxu0 0.0
        %846 = vmatprep.subr.mxu0 0.0
        %847 = vmatpush2.msra.mxu0 0.0
        %848 = vmatprep.subr.mxu0 0.0
        %849 = vmatpush2.msra.mxu0 0.0
        %850 = vmatprep.subr.mxu0 0.0
        %851 = vmatpush2.msra.mxu0 0.0
        %852 = vmatprep.subr.mxu0 0.0
        %853 = vmatpush2.msra.mxu0 0.0
        %854 = vmatprep.subr.mxu0 0.0
        %855 = vmatpush2.msra.mxu0 0.0
        %856 = vmatprep.subr.mxu0 0.0
        %857 = vmatpush2.msra.mxu0 0.0
        %858 = vmatprep.subr.mxu0 0.0
        %859 = vmatpush2.msra.mxu0 0.0
        %860 = vmatprep.subr.mxu0 0.0
        %861 = vmatpush2.msra.mxu0 0.0
        %862 = vmatprep.subr.mxu0 0.0
        %863 = vmatpush2.msra.mxu0 0.0
        %864 = vmatprep.mubr.f32.mxu0 0.0
        %865 = vmatmul.mubr.f32.gmra.mxu0 %v795
        %v866 = vpop.f32.mrf.mxu0
        %v867 = vadd.f32 0.0, %v866
        %v868 = vpop.f32.mrf.mxu0
        %869 = vmatprep.mubr.f32.mxu0 0.0
        %870 = vmatmul.mubr.f32.gmra.mxu0 %v798
        %v871 = vpop.f32.mrf.mxu0
        %v872 = vadd.f32 0.0, %v871
        %v873 = vpop.f32.mrf.mxu0
        %874 = vdwg.mxu0
        %v875 = vadd.f32 %v787, %v867
        %v876 = vadd.f32 %v788, %v872
        %s877 = scalar_lea.vmem [#allocation2], 160
        %v878 = vld [vmem:[%s877] sm:$0xff]
        %v879 = vld [vmem:[%s877 + $0x8] sm:$0xff]
        %v880 = vld [vmem:[%s877 + $0x10] sm:$0xff]
        %v881 = vld [vmem:[%s877 + $0x18] sm:$0xff]
        %v883 = vsel %vm450, %v403, 0
        %v886 = vsel %vm450, %v408, 0
        %888 = vmatprep.subr.mxu0 0.0
        %889 = vmatpush1.msra.mxu0 0.0
        %890 = vmatprep.subr.mxu0 0.0
        %891 = vmatpush1.msra.mxu0 0.0
        %892 = vmatprep.subr.mxu0 0.0
        %893 = vmatpush1.msra.mxu0 0.0
        %894 = vmatprep.subr.mxu0 0.0
        %895 = vmatpush1.msra.mxu0 0.0
        %896 = vmatprep.subr.mxu0 0.0
        %897 = vmatpush1.msra.mxu0 0.0
        %898 = vmatprep.subr.mxu0 0.0
        %899 = vmatpush1.msra.mxu0 0.0
        %900 = vmatprep.subr.mxu0 0.0
        %901 = vmatpush1.msra.mxu0 0.0
        %902 = vmatprep.subr.mxu0 0.0
        %903 = vmatpush1.msra.mxu0 0.0
        %904 = vmatprep.subr.mxu0 0.0
        %905 = vmatpush1.msra.mxu0 0.0
        %906 = vmatprep.subr.mxu0 0.0
        %907 = vmatpush1.msra.mxu0 0.0
        %908 = vmatprep.subr.mxu0 0.0
        %909 = vmatpush1.msra.mxu0 0.0
        %910 = vmatprep.subr.mxu0 0.0
        %911 = vmatpush1.msra.mxu0 0.0
        %912 = vmatprep.subr.mxu0 0.0
        %913 = vmatpush1.msra.mxu0 %v881
        %914 = vmatprep.subr.mxu0 0.0
        %915 = vmatpush1.msra.mxu0 %v880
        %916 = vmatprep.subr.mxu0 0.0
        %917 = vmatpush1.msra.mxu0 %v879
        %918 = vmatprep.subr.mxu0 0.0
        %919 = vmatpush1.msra.mxu0 %v878
        %920 = vmatprep.subr.mxu0 0.0
        %921 = vmatpush2.msra.mxu0 0.0
        %922 = vmatprep.subr.mxu0 0.0
        %923 = vmatpush2.msra.mxu0 0.0
        %924 = vmatprep.subr.mxu0 0.0
        %925 = vmatpush2.msra.mxu0 0.0
        %926 = vmatprep.subr.mxu0 0.0
        %927 = vmatpush2.msra.mxu0 0.0
        %928 = vmatprep.subr.mxu0 0.0
        %929 = vmatpush2.msra.mxu0 0.0
        %930 = vmatprep.subr.mxu0 0.0
        %931 = vmatpush2.msra.mxu0 0.0
        %932 = vmatprep.subr.mxu0 0.0
        %933 = vmatpush2.msra.mxu0 0.0
        %934 = vmatprep.subr.mxu0 0.0
        %935 = vmatpush2.msra.mxu0 0.0
        %936 = vmatprep.subr.mxu0 0.0
        %937 = vmatpush2.msra.mxu0 0.0
        %938 = vmatprep.subr.mxu0 0.0
        %939 = vmatpush2.msra.mxu0 0.0
        %940 = vmatprep.subr.mxu0 0.0
        %941 = vmatpush2.msra.mxu0 0.0
        %942 = vmatprep.subr.mxu0 0.0
        %943 = vmatpush2.msra.mxu0 0.0
        %944 = vmatprep.subr.mxu0 0.0
        %945 = vmatpush2.msra.mxu0 0.0
        %946 = vmatprep.subr.mxu0 0.0
        %947 = vmatpush2.msra.mxu0 0.0
        %948 = vmatprep.subr.mxu0 0.0
        %949 = vmatpush2.msra.mxu0 0.0
        %950 = vmatprep.subr.mxu0 0.0
        %951 = vmatpush2.msra.mxu0 0.0
        %952 = vmatprep.mubr.f32.mxu0 0.0
        %953 = vmatmul.mubr.f32.gmra.mxu0 %v883
        %v954 = vpop.f32.mrf.mxu0
        %v955 = vadd.f32 0.0, %v954
        %v956 = vpop.f32.mrf.mxu0
        %957 = vmatprep.mubr.f32.mxu0 0.0
        %958 = vmatmul.mubr.f32.gmra.mxu0 %v886
        %v959 = vpop.f32.mrf.mxu0
        %v960 = vadd.f32 0.0, %v959
        %v961 = vpop.f32.mrf.mxu0
        %962 = vdwg.mxu0
        %v963 = vadd.f32 %v875, %v955
        %v964 = vadd.f32 %v876, %v960
        %s965 = scalar_lea.vmem [#allocation2], 192
        %v966 = vld [vmem:[%s965] sm:$0xff]
        %v967 = vld [vmem:[%s965 + $0x8] sm:$0xff]
        %v968 = vld [vmem:[%s965 + $0x10] sm:$0xff]
        %v969 = vld [vmem:[%s965 + $0x18] sm:$0xff]
        %v971 = vsel %vm450, %v413, 0
        %v974 = vsel %vm450, %v418, 0
        %976 = vmatprep.subr.mxu0 0.0
        %977 = vmatpush1.msra.mxu0 0.0
        %978 = vmatprep.subr.mxu0 0.0
        %979 = vmatpush1.msra.mxu0 0.0
        %980 = vmatprep.subr.mxu0 0.0
        %981 = vmatpush1.msra.mxu0 0.0
        %982 = vmatprep.subr.mxu0 0.0
        %983 = vmatpush1.msra.mxu0 0.0
        %984 = vmatprep.subr.mxu0 0.0
        %985 = vmatpush1.msra.mxu0 0.0
        %986 = vmatprep.subr.mxu0 0.0
        %987 = vmatpush1.msra.mxu0 0.0
        %988 = vmatprep.subr.mxu0 0.0
        %989 = vmatpush1.msra.mxu0 0.0
        %990 = vmatprep.subr.mxu0 0.0
        %991 = vmatpush1.msra.mxu0 0.0
        %992 = vmatprep.subr.mxu0 0.0
        %993 = vmatpush1.msra.mxu0 0.0
        %994 = vmatprep.subr.mxu0 0.0
        %995 = vmatpush1.msra.mxu0 0.0
        %996 = vmatprep.subr.mxu0 0.0
        %997 = vmatpush1.msra.mxu0 0.0
        %998 = vmatprep.subr.mxu0 0.0
        %999 = vmatpush1.msra.mxu0 0.0
        %1000 = vmatprep.subr.mxu0 0.0
        %1001 = vmatpush1.msra.mxu0 %v969
        %1002 = vmatprep.subr.mxu0 0.0
        %1003 = vmatpush1.msra.mxu0 %v968
        %1004 = vmatprep.subr.mxu0 0.0
        %1005 = vmatpush1.msra.mxu0 %v967
        %1006 = vmatprep.subr.mxu0 0.0
        %1007 = vmatpush1.msra.mxu0 %v966
        %1008 = vmatprep.subr.mxu0 0.0
        %1009 = vmatpush2.msra.mxu0 0.0
        %1010 = vmatprep.subr.mxu0 0.0
        %1011 = vmatpush2.msra.mxu0 0.0
        %1012 = vmatprep.subr.mxu0 0.0
        %1013 = vmatpush2.msra.mxu0 0.0
        %1014 = vmatprep.subr.mxu0 0.0
        %1015 = vmatpush2.msra.mxu0 0.0
        %1016 = vmatprep.subr.mxu0 0.0
        %1017 = vmatpush2.msra.mxu0 0.0
        %1018 = vmatprep.subr.mxu0 0.0
        %1019 = vmatpush2.msra.mxu0 0.0
        %1020 = vmatprep.subr.mxu0 0.0
        %1021 = vmatpush2.msra.mxu0 0.0
        %1022 = vmatprep.subr.mxu0 0.0
        %1023 = vmatpush2.msra.mxu0 0.0
        %1024 = vmatprep.subr.mxu0 0.0
        %1025 = vmatpush2.msra.mxu0 0.0
        %1026 = vmatprep.subr.mxu0 0.0
        %1027 = vmatpush2.msra.mxu0 0.0
        %1028 = vmatprep.subr.mxu0 0.0
        %1029 = vmatpush2.msra.mxu0 0.0
        %1030 = vmatprep.subr.mxu0 0.0
        %1031 = vmatpush2.msra.mxu0 0.0
        %1032 = vmatprep.subr.mxu0 0.0
        %1033 = vmatpush2.msra.mxu0 0.0
        %1034 = vmatprep.subr.mxu0 0.0
        %1035 = vmatpush2.msra.mxu0 0.0
        %1036 = vmatprep.subr.mxu0 0.0
        %1037 = vmatpush2.msra.mxu0 0.0
        %1038 = vmatprep.subr.mxu0 0.0
        %1039 = vmatpush2.msra.mxu0 0.0
        %1040 = vmatprep.mubr.f32.mxu0 0.0
        %1041 = vmatmul.mubr.f32.gmra.mxu0 %v971
        %v1042 = vpop.f32.mrf.mxu0
        %v1043 = vadd.f32 0.0, %v1042
        %v1044 = vpop.f32.mrf.mxu0
        %1045 = vmatprep.mubr.f32.mxu0 0.0
        %1046 = vmatmul.mubr.f32.gmra.mxu0 %v974
        %v1047 = vpop.f32.mrf.mxu0
        %v1048 = vadd.f32 0.0, %v1047
        %v1049 = vpop.f32.mrf.mxu0
        %1050 = vdwg.mxu0
        %v1051 = vadd.f32 %v963, %v1043
        %v1052 = vadd.f32 %v964, %v1048
        %s1053 = scalar_lea.vmem [#allocation2], 224
        %v1054 = vld [vmem:[%s1053] sm:$0xff]
        %v1055 = vld [vmem:[%s1053 + $0x8] sm:$0xff]
        %v1056 = vld [vmem:[%s1053 + $0x10] sm:$0xff]
        %v1057 = vld [vmem:[%s1053 + $0x18] sm:$0xff]
        %v1059 = vsel %vm450, %v423, 0
        %v1062 = vsel %vm450, %v428, 0
        %1064 = vmatprep.subr.mxu0 0.0
        %1065 = vmatpush1.msra.mxu0 0.0
        %1066 = vmatprep.subr.mxu0 0.0
        %1067 = vmatpush1.msra.mxu0 0.0
        %1068 = vmatprep.subr.mxu0 0.0
        %1069 = vmatpush1.msra.mxu0 0.0
        %1070 = vmatprep.subr.mxu0 0.0
        %1071 = vmatpush1.msra.mxu0 0.0
        %1072 = vmatprep.subr.mxu0 0.0
        %1073 = vmatpush1.msra.mxu0 0.0
        %1074 = vmatprep.subr.mxu0 0.0
        %1075 = vmatpush1.msra.mxu0 0.0
        %1076 = vmatprep.subr.mxu0 0.0
        %1077 = vmatpush1.msra.mxu0 0.0
        %1078 = vmatprep.subr.mxu0 0.0
        %1079 = vmatpush1.msra.mxu0 0.0
        %1080 = vmatprep.subr.mxu0 0.0
        %1081 = vmatpush1.msra.mxu0 0.0
        %1082 = vmatprep.subr.mxu0 0.0
        %1083 = vmatpush1.msra.mxu0 0.0
        %1084 = vmatprep.subr.mxu0 0.0
        %1085 = vmatpush1.msra.mxu0 0.0
        %1086 = vmatprep.subr.mxu0 0.0
        %1087 = vmatpush1.msra.mxu0 0.0
        %1088 = vmatprep.subr.mxu0 0.0
        %1089 = vmatpush1.msra.mxu0 %v1057
        %1090 = vmatprep.subr.mxu0 0.0
        %1091 = vmatpush1.msra.mxu0 %v1056
        %1092 = vmatprep.subr.mxu0 0.0
        %1093 = vmatpush1.msra.mxu0 %v1055
        %1094 = vmatprep.subr.mxu0 0.0
        %1095 = vmatpush1.msra.mxu0 %v1054
        %1096 = vmatprep.subr.mxu0 0.0
        %1097 = vmatpush2.msra.mxu0 0.0
        %1098 = vmatprep.subr.mxu0 0.0
        %1099 = vmatpush2.msra.mxu0 0.0
        %1100 = vmatprep.subr.mxu0 0.0
        %1101 = vmatpush2.msra.mxu0 0.0
        %1102 = vmatprep.subr.mxu0 0.0
        %1103 = vmatpush2.msra.mxu0 0.0
        %1104 = vmatprep.subr.mxu0 0.0
        %1105 = vmatpush2.msra.mxu0 0.0
        %1106 = vmatprep.subr.mxu0 0.0
        %1107 = vmatpush2.msra.mxu0 0.0
        %1108 = vmatprep.subr.mxu0 0.0
        %1109 = vmatpush2.msra.mxu0 0.0
        %1110 = vmatprep.subr.mxu0 0.0
        %1111 = vmatpush2.msra.mxu0 0.0
        %1112 = vmatprep.subr.mxu0 0.0
        %1113 = vmatpush2.msra.mxu0 0.0
        %1114 = vmatprep.subr.mxu0 0.0
        %1115 = vmatpush2.msra.mxu0 0.0
        %1116 = vmatprep.subr.mxu0 0.0
        %1117 = vmatpush2.msra.mxu0 0.0
        %1118 = vmatprep.subr.mxu0 0.0
        %1119 = vmatpush2.msra.mxu0 0.0
        %1120 = vmatprep.subr.mxu0 0.0
        %1121 = vmatpush2.msra.mxu0 0.0
        %1122 = vmatprep.subr.mxu0 0.0
        %1123 = vmatpush2.msra.mxu0 0.0
        %1124 = vmatprep.subr.mxu0 0.0
        %1125 = vmatpush2.msra.mxu0 0.0
        %1126 = vmatprep.subr.mxu0 0.0
        %1127 = vmatpush2.msra.mxu0 0.0
        %1128 = vmatprep.mubr.f32.mxu0 0.0
        %1129 = vmatmul.mubr.f32.gmra.mxu0 %v1059
        %v1130 = vpop.f32.mrf.mxu0
        %v1131 = vadd.f32 0.0, %v1130
        %v1132 = vpop.f32.mrf.mxu0
        %1133 = vmatprep.mubr.f32.mxu0 0.0
        %1134 = vmatmul.mubr.f32.gmra.mxu0 %v1062
        %v1135 = vpop.f32.mrf.mxu0
        %v1136 = vadd.f32 0.0, %v1135
        %v1137 = vpop.f32.mrf.mxu0
        %1138 = vdwg.mxu0
        %v1139 = vadd.f32 %v1051, %v1131
        %v1140 = vadd.f32 %v1052, %v1136
        %s1141 = scalar_lea.vmem [#allocation2], 256
        %v1142 = vld [vmem:[%s1141] sm:$0xff]
        %v1143 = vld [vmem:[%s1141 + $0x8] sm:$0xff]
        %v1144 = vld [vmem:[%s1141 + $0x10] sm:$0xff]
        %v1145 = vld [vmem:[%s1141 + $0x18] sm:$0xff]
        %v1147 = vsel %vm450, %v433, 0
        %v1150 = vsel %vm450, %v438, 0
        %1152 = vmatprep.subr.mxu0 0.0
        %1153 = vmatpush1.msra.mxu0 0.0
        %1154 = vmatprep.subr.mxu0 0.0
        %1155 = vmatpush1.msra.mxu0 0.0
        %1156 = vmatprep.subr.mxu0 0.0
        %1157 = vmatpush1.msra.mxu0 0.0
        %1158 = vmatprep.subr.mxu0 0.0
        %1159 = vmatpush1.msra.mxu0 0.0
        %1160 = vmatprep.subr.mxu0 0.0
        %1161 = vmatpush1.msra.mxu0 0.0
        %1162 = vmatprep.subr.mxu0 0.0
        %1163 = vmatpush1.msra.mxu0 0.0
        %1164 = vmatprep.subr.mxu0 0.0
        %1165 = vmatpush1.msra.mxu0 0.0
        %1166 = vmatprep.subr.mxu0 0.0
        %1167 = vmatpush1.msra.mxu0 0.0
        %1168 = vmatprep.subr.mxu0 0.0
        %1169 = vmatpush1.msra.mxu0 0.0
        %1170 = vmatprep.subr.mxu0 0.0
        %1171 = vmatpush1.msra.mxu0 0.0
        %1172 = vmatprep.subr.mxu0 0.0
        %1173 = vmatpush1.msra.mxu0 0.0
        %1174 = vmatprep.subr.mxu0 0.0
        %1175 = vmatpush1.msra.mxu0 0.0
        %1176 = vmatprep.subr.mxu0 0.0
        %1177 = vmatpush1.msra.mxu0 %v1145
        %1178 = vmatprep.subr.mxu0 0.0
        %1179 = vmatpush1.msra.mxu0 %v1144
        %1180 = vmatprep.subr.mxu0 0.0
        %1181 = vmatpush1.msra.mxu0 %v1143
        %1182 = vmatprep.subr.mxu0 0.0
        %1183 = vmatpush1.msra.mxu0 %v1142
        %1184 = vmatprep.subr.mxu0 0.0
        %1185 = vmatpush2.msra.mxu0 0.0
        %1186 = vmatprep.subr.mxu0 0.0
        %1187 = vmatpush2.msra.mxu0 0.0
        %1188 = vmatprep.subr.mxu0 0.0
        %1189 = vmatpush2.msra.mxu0 0.0
        %1190 = vmatprep.subr.mxu0 0.0
        %1191 = vmatpush2.msra.mxu0 0.0
        %1192 = vmatprep.subr.mxu0 0.0
        %1193 = vmatpush2.msra.mxu0 0.0
        %1194 = vmatprep.subr.mxu0 0.0
        %1195 = vmatpush2.msra.mxu0 0.0
        %1196 = vmatprep.subr.mxu0 0.0
        %1197 = vmatpush2.msra.mxu0 0.0
        %1198 = vmatprep.subr.mxu0 0.0
        %1199 = vmatpush2.msra.mxu0 0.0
        %1200 = vmatprep.subr.mxu0 0.0
        %1201 = vmatpush2.msra.mxu0 0.0
        %1202 = vmatprep.subr.mxu0 0.0
        %1203 = vmatpush2.msra.mxu0 0.0
        %1204 = vmatprep.subr.mxu0 0.0
        %1205 = vmatpush2.msra.mxu0 0.0
        %1206 = vmatprep.subr.mxu0 0.0
        %1207 = vmatpush2.msra.mxu0 0.0
        %1208 = vmatprep.subr.mxu0 0.0
        %1209 = vmatpush2.msra.mxu0 0.0
        %1210 = vmatprep.subr.mxu0 0.0
        %1211 = vmatpush2.msra.mxu0 0.0
        %1212 = vmatprep.subr.mxu0 0.0
        %1213 = vmatpush2.msra.mxu0 0.0
        %1214 = vmatprep.subr.mxu0 0.0
        %1215 = vmatpush2.msra.mxu0 0.0
        %1216 = vmatprep.mubr.f32.mxu0 0.0
        %1217 = vmatmul.mubr.f32.gmra.mxu0 %v1147
        %v1218 = vpop.f32.mrf.mxu0
        %v1219 = vadd.f32 0.0, %v1218
        %v1220 = vpop.f32.mrf.mxu0
        %1221 = vmatprep.mubr.f32.mxu0 0.0
        %1222 = vmatmul.mubr.f32.gmra.mxu0 %v1150
        %v1223 = vpop.f32.mrf.mxu0
        %v1224 = vadd.f32 0.0, %v1223
        %v1225 = vpop.f32.mrf.mxu0
        %1226 = vdwg.mxu0
        %v1227 = vadd.f32 %v1139, %v1219
        %v1228 = vadd.f32 %v1140, %v1224
        %v1229 = vld [vmem:[%s2] sm:$0x1]
        %v1231 = vlaneseq
        %v1232 = vshrl.u32 %v1231, 7
        %v1233 = vsub.s32 0, %v1232
        %v1234 = vrot.slane %v1229, %v1233
        %v1236 = vadd.f32 %v1227, %v1234
        %v1237 = vadd.f32 %v1228, %v1234
        %1238 = vst [vmem:[%s205] sm:$0xff] %v1236
        %1239 = vst [vmem:[%s205 + $0x8] sm:$0xff] %v1237
        %s1240 = sand.u32 %s116, 1
        %s1241 = scalar_lea.sflag [#allocation4], %s1240
        %s1242 = sand.u32 %s116, 1
        %s1243 = smul.addr %s1242, 16
        %s1244 = scalar_lea.vmem [#allocation5], %s1243
        // Predicated region
        $region41: #{tpu_custom_call.1} parent=35 // pred_check
          %p1245 = pneg %p126
        $region42: #{tpu_custom_call.1} parent=35 // pred_check_branch
          %1247 = sbr.rel (%p1245) target = $region44
        $region43: #{tpu_custom_call.1} parent=35 // pred_region
          %s1249 = ssub.s32 256, 256
          %1250 = vsyncadd %s1241, %s1249
          %s1251 = smul.addr %s19, 2
          %s1252 = smul.addr %s1251, 128
          %s1253 = scalar_lea.hbm %s4, %s1252
          %s1254 = sshll.u32 %s1244, 4
          %s1255 = int_to_ptr.vmem [resolvable:$true] %s1254
          %1260 = dma.vmem_to_hbm [thread:$0]  %s1255, 256, %s1253, %s1241, 128, 128, 8
        $region44: #{tpu_custom_call.1} parent=35 // pred_fallthru
          _
      $region36: #{tpu_custom_call.1} parent=5 // pred_fallthru
        _
      %p1261 = scmp.le.s32.totalorder 2, %s14
      // Predicated region
      $region45: #{tpu_custom_call.1} parent=5 // pred_check
        %p1262 = pneg %p1261
      $region46: #{tpu_custom_call.1} parent=5 // pred_check_branch
        %1264 = sbr.rel (%p1262) target = $region48
      $region47: #{tpu_custom_call.1} parent=5 // pred_region
        %s1265 = ssub.s32 %s14, 2
        // Predicated region
        $region49: #{tpu_custom_call.1} parent=47 // pred_check
          %p1266 = pneg %p132
        $region50: #{tpu_custom_call.1} parent=47 // pred_check_branch
          %1268 = sbr.rel (%p1266) target = $region52
        $region51: #{tpu_custom_call.1} parent=47 // pred_region
          %s1269 = sand.u32 %s117, 1
          %s1270 = scalar_lea.sflag [#allocation4], %s1269
          %s1271 = sand.u32 %s117, 1
          %s1272 = smul.addr %s1271, 16
          %s1273 = scalar_lea.vmem [#allocation5], %s1272
          %1274 = dma.done %s1270, 256
        $region52: #{tpu_custom_call.1} parent=47 // pred_fallthru
          _
      $region48: #{tpu_custom_call.1} parent=5 // pred_fallthru
        _
    $region6: #{tpu_custom_call.1} parent=1 // loop_footer
      %s18 = sadd.s32 1, %s14
    $region7: #{tpu_custom_call.1} parent=1 // loop_footer_branch
      %13 = sbr.rel target = $region3
    $region8: #{tpu_custom_call.1} parent=1 // loop_exit
      _
    %1275 = vsyncpa [#allocation3], 1
    %s1276 = scalar_lea.sflag [#allocation3], 1
    %1277 = vsyncpa %s1276, 1
    %1278 = vsyncpa [#allocation4], 1
    %s1279 = scalar_lea.sflag [#allocation4], 1
    %1280 = vsyncpa %s1279, 1

</llo_original>
